<compile_context>
chip_gen: v7x
topology: tpu7x:2x2x1
jax: 0.10.0
libtpu: 0.0.40
codegen_flags: <defaults>
</compile_context>

<pallas_src>
import functools

import jax
import jax.numpy as jnp
from jax.experimental import pallas as pl
from jax.experimental.pallas import tpu as pltpu


def _round_up(x, m):
    return ((x + m - 1) // m) * m


def _vmem_capacity_bytes():
    """Physical VMEM per TensorCore; conservative fallback if the query fails."""
    try:
        cap = int(pltpu.get_tpu_info().vmem_capacity_bytes)
        if cap > 0:
            return cap
    except Exception:
        pass
    return 64 * 1024 * 1024  # v7x per-TC VMEM — smallest of v5e/v6e/v7x


def _focal_loss_kernel(*refs, gamma, n_total, has_weight):
    if has_weight:
        x_ref, t_ref, w_ref, o_ref = refs
    else:
        x_ref, t_ref, o_ref = refs
        w_ref = None

    i = pl.program_id(1)  # reduction (batch-tile) axis, innermost

    @pl.when(i == 0)
    def _():
        o_ref[...] = jnp.zeros_like(o_ref)

    x = x_ref[...].astype(jnp.float32)  # (tn, C) logits tile, f32 after load
    t = t_ref[...]                      # (tn, 1) int32 targets
    tn, c = x.shape

    # Target-logit gather: one compare + select + lane max (no f32 one-hot).
    class_ids = jax.lax.broadcasted_iota(jnp.int32, (tn, c), 1)
    tmask = class_ids == t
    logit_t = jnp.max(jnp.where(tmask, x, -jnp.inf), axis=-1, keepdims=True)

    # Numerically stable logsumexp over classes.
    x_max = jnp.max(x, axis=-1, keepdims=True)                       # (tn, 1)
    sum_exp = jnp.sum(jnp.exp(x - x_max), axis=-1, keepdims=True)    # (tn, 1)
    lse = x_max + jnp.log(sum_exp)

    ce = lse - logit_t                                               # (tn, 1)
    if has_weight:
        ce = w_ref[...] * ce      # per-sample w[target], gathered in wrapper

    # Focal modulation; gamma is a compile-time Python constant.
    if gamma == 0.0:
        focal = ce
    else:
        p = jnp.exp(-ce)
        one_m_p = 1.0 - p
        gi = int(gamma)
        if float(gi) == float(gamma) and 0 < gi <= 8:
            mod = one_m_p
            for _ in range(gi - 1):          # integer gamma: plain multiplies
                mod = mod * one_m_p
        else:
            mod = jnp.power(one_m_p, gamma)
        focal = mod * ce

    # Mask batch-padding rows using the global row index.
    tile = pl.program_id(0) * pl.num_programs(1) + i
    row = jax.lax.broadcasted_iota(jnp.int32, (tn, 1), 0) + tile * tn
    o_ref[...] += jnp.where(row < n_total, focal, 0.0)   # per-row partial sums


def focal_loss_pallas(logits, target, *, weight=None, gamma=0.0,
                      max_rows_per_tile=1024):
    """logits: (N, C) float (f32/bf16); target: (N,) int; weight: optional (C,).
    Returns the scalar focal loss (mean over the batch)."""
    n, c = logits.shape
    itemsize = jnp.dtype(logits.dtype).itemsize
    cap = _vmem_capacity_bytes()

    # Largest multiple-of-8 batch tile whose double-buffered logits window fits
    # ~40% of VMEM (the rest is headroom for targets/weights/output buffers and
    # compiler scratch). Tile-size scaling on streaming kernels plateaus around
    # 512-1024 rows, hence the cap.
    budget = int(cap * 0.40)
    rows_fit = budget // (2 * c * itemsize)
    # TODO(synk): add a class-axis (online-softmax) grid dimension for
    # vocab-scale C where even an 8-row double-buffered tile exceeds the budget.
    tn = int(min(max_rows_per_tile, max(8, (rows_fit // 8) * 8), _round_up(n, 8)))

    tiles = pl.cdiv(n, tn)
    # Outer 2-way split: sharded across TensorCores on megacore parts (v7x);
    # a serial outer loop of length 2 on single-TC parts (near-zero cost).
    num_splits = 2 if tiles >= 2 else 1
    tiles_per_split = pl.cdiv(tiles, num_splits)
    n_pad = num_splits * tiles_per_split * tn

    x = logits  # keep the HBM dtype (bf16 stays bf16); kernel casts after load
    t = target.astype(jnp.int32).reshape(n, 1)
    if n_pad != n:
        x = jnp.pad(x, ((0, n_pad - n), (0, 0)))
        t = jnp.pad(t, ((0, n_pad - n), (0, 0)))

    has_weight = weight is not None
    inputs = [x, t]
    in_specs = [
        pl.BlockSpec((tn, c), lambda p, i, s=tiles_per_split: (p * s + i, 0)),
        pl.BlockSpec((tn, 1), lambda p, i, s=tiles_per_split: (p * s + i, 0)),
    ]
    if has_weight:
        w_row = weight.astype(jnp.float32)[target].reshape(n, 1)
        if n_pad != n:
            w_row = jnp.pad(w_row, ((0, n_pad - n), (0, 0)))
        inputs.append(w_row)
        in_specs.append(
            pl.BlockSpec((tn, 1), lambda p, i, s=tiles_per_split: (p * s + i, 0)))

    # Scoped-VMEM limit sized to the actual working set (+margin), never above
    # the physical per-core capacity.
    vmem_est = 2 * tn * c * itemsize + 6 * tn * 4
    vmem_limit = int(min(cap, max(vmem_est * 5 // 4 + (2 << 20),
                                  16 * 1024 * 1024)))

    kernel = functools.partial(
        _focal_loss_kernel, gamma=float(gamma), n_total=n, has_weight=has_weight)

    partials = pl.pallas_call(
        kernel,
        out_shape=jax.ShapeDtypeStruct((num_splits * tn, 1), jnp.float32),
        grid=(num_splits, tiles_per_split),
        in_specs=in_specs,
        out_specs=pl.BlockSpec((tn, 1), lambda p, i: (p, 0)),
        compiler_params=pltpu.CompilerParams(
            dimension_semantics=("parallel", "arbitrary"),
            vmem_limit_bytes=vmem_limit,
        ),
    )(*inputs)

    # Final tree-reduce + mean in the wrapper (padded rows contributed 0).
    return jnp.sum(partials) / n


def _reference(logits, target, weight=None, gamma=0.0):
    # Pure-JAX reference of FocalLoss.forward.
    logp = jax.nn.log_softmax(logits.astype(jnp.float32), axis=-1)
    nll = -jnp.take_along_axis(logp, target[:, None], axis=-1)[:, 0]
    if weight is not None:
        nll = nll * weight.astype(jnp.float32)[target]
    p = jnp.exp(-nll)
    return jnp.mean((1.0 - p) ** gamma * nll)


if __name__ == "__main__":
    key = jax.random.PRNGKey(0)
    k1, k2, k3, k4, k5 = jax.random.split(key, 5)

    # Small classification shapes implied by the forward: batch=8, classes=32.
    N, C = 8, 32
    logits = jax.random.normal(k1, (N, C), dtype=jnp.float32)
    target = jax.random.randint(k2, (N,), 0, C)
    weight = 0.5 + jax.random.uniform(k3, (C,), dtype=jnp.float32)
    gamma = 2.0

    # 1) Weighted, gamma > 0 path (f32 logits).
    loss = focal_loss_pallas(logits, target, weight=weight, gamma=gamma)
    jax.block_until_ready(loss)
    ref = _reference(logits, target, weight=weight, gamma=gamma)
    assert jnp.allclose(loss, ref, atol=1e-5, rtol=1e-5), (loss, ref)

    # 2) Module defaults (weight=None, gamma=0.0) -> plain mean cross entropy.
    loss0 = focal_loss_pallas(logits, target)
    jax.block_until_ready(loss0)
    ref0 = _reference(logits, target)
    assert jnp.allclose(loss0, ref0, atol=1e-5, rtol=1e-5), (loss0, ref0)

    # 3) bf16 logits stay bf16 in HBM (DMA narrows; kernel upcasts after load).
    logits_bf16 = logits.astype(jnp.bfloat16)
    loss_bf = focal_loss_pallas(logits_bf16, target, gamma=gamma)
    jax.block_until_ready(loss_bf)
    ref_bf = _reference(logits_bf16, target, gamma=gamma)
    assert jnp.allclose(loss_bf, ref_bf, atol=1e-4, rtol=1e-4), (loss_bf, ref_bf)

    # 4) Multi-tile path: forces tn=8 -> 5 tiles, 2-way split, padded rows masked.
    N2 = 40
    logits2 = jax.random.normal(k4, (N2, C), dtype=jnp.float32)
    target2 = jax.random.randint(k5, (N2,), 0, C)
    loss2 = focal_loss_pallas(logits2, target2, weight=weight, gamma=gamma,
                              max_rows_per_tile=8)
    jax.block_until_ready(loss2)
    ref2 = _reference(logits2, target2, weight=weight, gamma=gamma)
    assert jnp.allclose(loss2, ref2, atol=1e-5, rtol=1e-5), (loss2, ref2)

    print("KERNEL_OK")
</pallas_src>

<mosaic_0001>
module attributes {stable_mosaic.version = 11 : i64} {
  func.func @_focal_loss_kernel(%arg0: i32, %arg1: i32, %arg2: memref<8x32xf32, #tpu.memory_space<vmem>>, %arg3: memref<8x1xi32, #tpu.memory_space<vmem>>, %arg4: memref<8x1xf32, #tpu.memory_space<vmem>>, %arg5: memref<8x1xf32, #tpu.memory_space<vmem>>) attributes {dimension_semantics = [#tpu.dimension_semantics<parallel>, #tpu.dimension_semantics<arbitrary>], iteration_bounds = array<i64: 1, 1>, scalar_prefetch = 0 : i64, scratch_operands = 0 : i64, tpu.core_type = #tpu.core_type<tc>, window_params = [{transform_indices = @transform_0, window_bounds = array<i64: 8, 32>}, {transform_indices = @transform_1, window_bounds = array<i64: 8, 1>}, {transform_indices = @transform_2, window_bounds = array<i64: 8, 1>}, {transform_indices = @transform_3, window_bounds = array<i64: 8, 1>}]} {
    %c0_i32 = arith.constant 0 : i32
    %0 = arith.cmpi eq, %arg1, %c0_i32 : i32
    %1 = arith.extui %0 : i1 to i32
    %c0_i32_0 = arith.constant 0 : i32
    %2 = arith.cmpi ne, %1, %c0_i32_0 : i32
    scf.if %2 {
      %cst_17 = arith.constant 0.000000e+00 : f32
      %44 = vector.broadcast %cst_17 : f32 to vector<8x1xf32>
      %c0_18 = arith.constant 0 : index
      %c0_19 = arith.constant 0 : index
      %45 = vector.load %arg5[%c0_18, %c0_19] : memref<8x1xf32, #tpu.memory_space<vmem>>, vector<8x1xf32>
      tpu.vector_store %arg5[%c0_18, %c0_19], %44 {strides = array<i32>} : memref<8x1xf32, #tpu.memory_space<vmem>>, vector<8x1xf32>,
    } else {
    }
    %c0 = arith.constant 0 : index
    %c0_1 = arith.constant 0 : index
    %3 = vector.load %arg2[%c0, %c0_1] : memref<8x32xf32, #tpu.memory_space<vmem>>, vector<8x32xf32>
    %c0_2 = arith.constant 0 : index
    %c0_3 = arith.constant 0 : index
    %4 = vector.load %arg3[%c0_2, %c0_3] : memref<8x1xi32, #tpu.memory_space<vmem>>, vector<8x1xi32>
    %5 = tpu.iota {dimensions = array<i32: 1>} : vector<8x32xi32>
    %6 = vector.broadcast %4 : vector<8x1xi32> to vector<8x32xi32>
    %7 = arith.cmpi eq, %5, %6 : vector<8x32xi32>
    %cst = arith.constant 0xFF800000 : f32
    %8 = vector.broadcast %cst : f32 to vector<8x32xf32>
    %9 = arith.select %7, %3, %8 : vector<8x32xi1>, vector<8x32xf32>
    %cst_4 = arith.constant dense<0xFF800000> : vector<8xf32>
    %10 = vector.multi_reduction <maximumf>, %9, %cst_4 [1] : vector<8x32xf32> to vector<8xf32>
    %11 = vector.shape_cast %10 : vector<8xf32> to vector<8x1xf32>
    %cst_5 = arith.constant dense<0xFF800000> : vector<8xf32>
    %12 = vector.multi_reduction <maximumf>, %3, %cst_5 [1] : vector<8x32xf32> to vector<8xf32>
    %13 = vector.shape_cast %12 : vector<8xf32> to vector<8x1xf32>
    %14 = vector.broadcast %13 : vector<8x1xf32> to vector<8x32xf32>
    %15 = arith.subf %3, %14 : vector<8x32xf32>
    %16 = math.exp %15 : vector<8x32xf32>
    %cst_6 = arith.constant dense<0.000000e+00> : vector<8xf32>
    %17 = vector.multi_reduction <add>, %16, %cst_6 [1] : vector<8x32xf32> to vector<8xf32>
    %18 = vector.shape_cast %17 : vector<8xf32> to vector<8x1xf32>
    %19 = math.log %18 : vector<8x1xf32>
    %20 = arith.addf %13, %19 : vector<8x1xf32>
    %21 = arith.subf %20, %11 : vector<8x1xf32>
    %c0_7 = arith.constant 0 : index
    %c0_8 = arith.constant 0 : index
    %22 = vector.load %arg4[%c0_7, %c0_8] : memref<8x1xf32, #tpu.memory_space<vmem>>, vector<8x1xf32>
    %23 = arith.mulf %22, %21 : vector<8x1xf32>
    %cst_9 = arith.constant 0.000000e+00 : f32
    %24 = vector.broadcast %cst_9 : f32 to vector<8x1xf32>
    %25 = arith.subf %24, %23 : vector<8x1xf32>
    %26 = math.exp %25 : vector<8x1xf32>
    %cst_10 = arith.constant 1.000000e+00 : f32
    %27 = vector.broadcast %cst_10 : f32 to vector<8x1xf32>
    %28 = arith.subf %27, %26 : vector<8x1xf32>
    %29 = arith.mulf %28, %28 : vector<8x1xf32>
    %30 = arith.mulf %29, %23 : vector<8x1xf32>
    %c1_i32 = arith.constant 1 : i32
    %31 = arith.muli %arg0, %c1_i32 : i32
    %32 = arith.addi %31, %arg1 : i32
    %33 = tpu.iota {dimensions = array<i32: 0>} : vector<8x1xi32>
    %c8_i32 = arith.constant 8 : i32
    %34 = arith.muli %32, %c8_i32 : i32
    %35 = vector.broadcast %34 : i32 to vector<8x1xi32>
    %36 = arith.addi %33, %35 : vector<8x1xi32>
    %c0_11 = arith.constant 0 : index
    %c0_12 = arith.constant 0 : index
    %37 = vector.load %arg5[%c0_11, %c0_12] : memref<8x1xf32, #tpu.memory_space<vmem>>, vector<8x1xf32>
    %c8_i32_13 = arith.constant 8 : i32
    %38 = vector.broadcast %c8_i32_13 : i32 to vector<8x1xi32>
    %39 = arith.cmpi slt, %36, %38 : vector<8x1xi32>
    %cst_14 = arith.constant 0.000000e+00 : f32
    %40 = vector.broadcast %cst_14 : f32 to vector<8x1xf32>
    %41 = arith.select %39, %30, %40 : vector<8x1xi1>, vector<8x1xf32>
    %42 = arith.addf %37, %41 : vector<8x1xf32>
    %c0_15 = arith.constant 0 : index
    %c0_16 = arith.constant 0 : index
    %43 = vector.load %arg5[%c0_15, %c0_16] : memref<8x1xf32, #tpu.memory_space<vmem>>, vector<8x1xf32>
    tpu.vector_store %arg5[%c0_15, %c0_16], %42 {strides = array<i32>} : memref<8x1xf32, #tpu.memory_space<vmem>>, vector<8x1xf32>,
    return
  }
  func.func @transform_0(%arg0: i32, %arg1: i32) -> (i32, i32) {
    %c1_i32 = arith.constant 1 : i32
    %0 = arith.muli %arg0, %c1_i32 : i32
    %1 = arith.addi %0, %arg1 : i32
    %c0_i32 = arith.constant 0 : i32
    %c0_i32_0 = arith.constant 0 : i32
    return %1, %c0_i32 : i32, i32
  }
  func.func @transform_1(%arg0: i32, %arg1: i32) -> (i32, i32) {
    %c1_i32 = arith.constant 1 : i32
    %0 = arith.muli %arg0, %c1_i32 : i32
    %1 = arith.addi %0, %arg1 : i32
    %c0_i32 = arith.constant 0 : i32
    %c0_i32_0 = arith.constant 0 : i32
    return %1, %c0_i32 : i32, i32
  }
  func.func @transform_2(%arg0: i32, %arg1: i32) -> (i32, i32) {
    %c1_i32 = arith.constant 1 : i32
    %0 = arith.muli %arg0, %c1_i32 : i32
    %1 = arith.addi %0, %arg1 : i32
    %c0_i32 = arith.constant 0 : i32
    %c0_i32_0 = arith.constant 0 : i32
    return %1, %c0_i32 : i32, i32
  }
  func.func @transform_3(%arg0: i32, %arg1: i32) -> (i32, i32) {
    %c0_i32 = arith.constant 0 : i32
    %c0_i32_0 = arith.constant 0 : i32
    return %arg0, %c0_i32 : i32, i32
  }
}

</mosaic_0001>

<llo_original>
// kernel: tpu_custom_call.1
$region0: #{tpu_custom_call.1}
  #allocation0 [shape = 'u32[]', space=smem, size = 0x4, offset = 0x4, fixed_abs, tag = 'smem constant byte address 0x4 - core index']
  #allocation1 [shape = 'u32[144,128]{1,0:T(1,128)}', space=vmem, size = 0x12000, scoped, tag = 'internal scratch']
  %s0 = inlined_call_operand.vmem [shape: f32[8,32], index: 0, kind: input, shape index: {}]
  %s1 = inlined_call_operand.vmem [shape: s32[8,1], index: 1, kind: input, shape index: {}]
  %s2 = inlined_call_operand.vmem [shape: f32[8,1], index: 2, kind: input, shape index: {}]
  %s3 = inlined_call_operand.vmem [shape: f32[8,1], index: 3, kind: output, shape index: {}]
  %s4 = sld [smem:[#allocation0]]
  $region26: #{tpu_custom_call.1} parent=0
    _
  %s6 = ssub.s32 1, %s4
  %s7 = scalar_select 0, %s6, %s4
  // Predicated region
  $region2: #{tpu_custom_call.1} parent=0 // pred_check
    _
  $region3: #{tpu_custom_call.1} parent=0 // pred_check_branch
    %9 = sbr.rel (0) target = $region5
  $region4: #{tpu_custom_call.1} parent=0 // pred_region
    %s10 = sadd.s32 0, 0
    %p11 = scmp.lt.s32.totalorder %s10, 0
    %s12 = scalar_select %p11, %s10, 0
    %s13 = smul.addr %s12, 8
    %s14 = scalar_lea.vmem %s0, %s13
    %s15 = sadd.s32 0, 0
  $region5: #{tpu_custom_call.1} parent=0 // pred_fallthru
    _
  // Predicated region
  $region6: #{tpu_custom_call.1} parent=0 // pred_check
    _
  $region7: #{tpu_custom_call.1} parent=0 // pred_check_branch
    %17 = sbr.rel (0) target = $region9
  $region8: #{tpu_custom_call.1} parent=0 // pred_region
    %s18 = sadd.s32 0, 0
    %p19 = scmp.lt.s32.totalorder %s18, 0
    %s20 = scalar_select %p19, %s18, 0
    %s21 = smul.addr %s20, 8
    %s22 = scalar_lea.vmem %s1, %s21
    %s23 = sadd.s32 0, 0
  $region9: #{tpu_custom_call.1} parent=0 // pred_fallthru
    _
  // Predicated region
  $region10: #{tpu_custom_call.1} parent=0 // pred_check
    _
  $region11: #{tpu_custom_call.1} parent=0 // pred_check_branch
    %25 = sbr.rel (0) target = $region13
  $region12: #{tpu_custom_call.1} parent=0 // pred_region
    %s26 = sadd.s32 0, 0
    %p27 = scmp.lt.s32.totalorder %s26, 0
    %s28 = scalar_select %p27, %s26, 0
    %s29 = smul.addr %s28, 8
    %s30 = scalar_lea.vmem %s2, %s29
    %s31 = sadd.s32 0, 0
  $region13: #{tpu_custom_call.1} parent=0 // pred_fallthru
    _
  %s32 = sadd.s32 0, 0
  %p33 = scmp.lt.s32.totalorder %s32, 0
  %s34 = scalar_select %p33, %s32, 0
  %s35 = smul.addr %s34, 8
  %s36 = scalar_lea.vmem %s0, %s35
  %s37 = sadd.s32 0, 0
  %p38 = scmp.lt.s32.totalorder %s37, 0
  %s39 = scalar_select %p38, %s37, 0
  %s40 = smul.addr %s39, 8
  %s41 = scalar_lea.vmem %s1, %s40
  %s42 = sadd.s32 0, 0
  %p43 = scmp.lt.s32.totalorder %s42, 0
  %s44 = scalar_select %p43, %s42, 0
  %s45 = smul.addr %s44, 8
  %s46 = scalar_lea.vmem %s2, %s45
  %s47 = sadd.s32 0, 0
  %p48 = scmp.lt.s32.totalorder %s47, 0
  %s49 = scalar_select %p48, %s47, 0
  %s50 = smul.addr %s49, 8
  %s51 = scalar_lea.vmem %s0, %s50
  %s52 = sadd.s32 0, 0
  %s53 = sadd.s32 0, 0
  %p54 = scmp.lt.s32.totalorder %s53, 0
  %s55 = scalar_select %p54, %s53, 0
  %s56 = smul.addr %s55, 8
  %s57 = scalar_lea.vmem %s1, %s56
  %s58 = sadd.s32 0, 0
  %s59 = sadd.s32 0, 0
  %p60 = scmp.lt.s32.totalorder %s59, 0
  %s61 = scalar_select %p60, %s59, 0
  %s62 = smul.addr %s61, 8
  %s63 = scalar_lea.vmem %s2, %s62
  %s64 = sadd.s32 0, 0
  %p65 = scmp.eq.s32.totalorder 0, 0
  // Predicated region
  $region14: #{tpu_custom_call.1} parent=0 // pred_check
    %p66 = pneg %p65
  $region15: #{tpu_custom_call.1} parent=0 // pred_check_branch
    %68 = sbr.rel (%p66) target = $region17
  $region16: #{tpu_custom_call.1} parent=0 // pred_region
    %vm69 = vcmask 7168
    %70 = vst.msk [vmem:[%s3] sm:$0xff] %vm69, 0.0
  $region17: #{tpu_custom_call.1} parent=0 // pred_fallthru
    _
  %v71 = vld [vmem:[%s51] sm:$0xff]
  %v72 = vld [vmem:[%s57] sm:$0xff]
  %v73 = vlaneseq
  %v74 = vand.u32 %v73, 127
  %75 = vset.pattern.permute.xlu0 0
  %76 = vperm.xlu0 %75, %v72
  %v77 = vpop.permute.xlu0 %76
  %vm78 = vcmp.eq.s32.totalorder %v74, %v77
  %v79 = vsel %vm78, %v71, -inf
  %vm80 = vcmask 261120
  %v81 = vsel %vm80, %v79, -inf
  %82 = vmax.xlane.f32.xlu0 %v81
  %v83 = vpop.xlane.xlu0 %82
  %v84 = vsel %vm80, %v71, -inf
  %85 = vmax.xlane.f32.xlu0 %v84
  %v86 = vpop.xlane.xlu0 %85
  %v87 = vsub.f32 %v71, %v86
  %v88 = vmul.f32 %v87, 1.442695
  %v89 = vpow.pop %v88
  %v90 = vsel %vm80, %v89, 0.0
  %91 = vadd.xlane.f32.xlu0 %v90
  %v92 = vpop.xlane.xlu0 %91
  %v93 = vlog2.pop %v92
  %v94 = vmul.f32 %v93, 0.6931472
  %v95 = vadd.f32 %v86, %v94
  %v96 = vsub.f32 %v95, %v83
  %v97 = vld [vmem:[%s63] sm:$0xff]
  %v98 = vmul.f32 %v97, %v96
  %v99 = vsub.f32 0.0, %v98
  %v100 = vmul.f32 %v99, 1.442695
  %v101 = vpow.pop %v100
  %v102 = vsub.f32 1.0, %v101
  %v103 = vmul.f32 %v102, %v102
  %v104 = vmul.f32 %v103, %v98
  %s105 = sadd.s32 0, 0
  %v106 = vlaneseq
  %v107 = vshrl.u32 %v106, 7
  %s108 = smul.u32 %s105, 8
  %v109 = vstv %s108
  %v110 = vadd.s32 %v107, %v109
  %v111 = vld [vmem:[%s3] sm:$0xff]
  %vm112 = vcmp.lt.s32.totalorder %v110, 8
  %v113 = vsel %vm112, %v104, 0.0
  %v114 = vadd.f32 %v111, %v113
  %vm115 = vcmask 7168
  %116 = vst.msk [vmem:[%s3] sm:$0xff] %vm115, %v114
  // Predicated region
  $region18: #{tpu_custom_call.1} parent=0 // pred_check
    _
  $region19: #{tpu_custom_call.1} parent=0 // pred_check_branch
    %118 = sbr.rel (0) target = $region21
  $region20: #{tpu_custom_call.1} parent=0 // pred_region
    _
  $region21: #{tpu_custom_call.1} parent=0 // pred_fallthru
    _
  // Predicated region
  $region22: #{tpu_custom_call.1} parent=0 // pred_check
    _
  $region23: #{tpu_custom_call.1} parent=0 // pred_check_branch
    %120 = sbr.rel (0) target = $region25
  $region24: #{tpu_custom_call.1} parent=0 // pred_region
    _
  $region25: #{tpu_custom_call.1} parent=0 // pred_fallthru
    _

</llo_original>
